<compile_context>
chip_gen: v5e
topology: v5e:2x2
jax: 0.10.0
libtpu: 0.0.40
codegen_flags: <defaults>
</compile_context>

<pallas_src>
import functools

import jax
import jax.numpy as jnp
from jax.experimental import pallas as pl
from jax.experimental.pallas import tpu as pltpu


def _make_scalar_sum_kernel(n):
    """Build a kernel summing `n` scalar SMEM inputs into a (1,) SMEM output."""

    def kernel(*refs):
        in_refs = refs[:n]
        o_ref = refs[n]
        # Unrolled chain of scalar adds on the scalar ALU (K is static & tiny).
        total = in_refs[0][0]
        for r in in_refs[1:]:
            total = total + r[0]
        o_ref[0] = total

    return kernel


@functools.lru_cache(maxsize=None)
def _build_sum_call(n):
    """Gridless pallas_call: n SMEM scalar inputs -> (1,) SMEM scalar output."""
    smem_spec = pl.BlockSpec(memory_space=pltpu.MemorySpace.SMEM)
    return pl.pallas_call(
        _make_scalar_sum_kernel(n),
        out_shape=jax.ShapeDtypeStruct((1,), jnp.float32),
        in_specs=[smem_spec] * n,
        out_specs=smem_spec,
    )


def simple_loss(loss_dict):
    """JAX/Pallas equivalent of SimpleLoss.forward.

    Args:
      loss_dict: dict[str, scalar jnp array] of per-task losses.
    Returns:
      (loss_total: f32 scalar, coefficients: dict[str, float])
    """
    keys = list(loss_dict.keys())
    coefficients = {k: 1.0 for k in keys}

    # No jnp.stack / concatenate glue: each scalar loss becomes its own (1,)
    # SMEM operand of the kernel (reshape of a () scalar is free).
    scalars = [
        jnp.asarray(loss_dict[k], dtype=jnp.float32).reshape(1) for k in keys
    ]

    # TODO(synk): when producer losses are themselves Pallas kernels, fold this
    # sum into the last producer's epilogue instead of a standalone launch.
    loss_total = _build_sum_call(len(scalars))(*scalars)[0]
    return loss_total, coefficients


if __name__ == "__main__":
    key = jax.random.PRNGKey(0)
    task_names = ["seg", "depth", "normal", "edge", "cls"]
    vals = jax.random.uniform(key, (len(task_names),), dtype=jnp.float32)
    loss_dict = {name: vals[i] for i, name in enumerate(task_names)}

    loss_total, coeffs = simple_loss(loss_dict)
    loss_total = jax.block_until_ready(loss_total)

    # Reference check against plain JAX sum.
    ref = jnp.sum(vals)
    assert jnp.allclose(loss_total, ref, rtol=1e-6, atol=1e-6), (loss_total, ref)
    assert all(v == 1.0 for v in coeffs.values())
    print("KERNEL_OK")
</pallas_src>

<mosaic_0001>
module attributes {stable_mosaic.version = 11 : i64} {
  func.func @kernel(%arg0: memref<1xf32, #tpu.memory_space<smem>>, %arg1: memref<1xf32, #tpu.memory_space<smem>>, %arg2: memref<1xf32, #tpu.memory_space<smem>>, %arg3: memref<1xf32, #tpu.memory_space<smem>>, %arg4: memref<1xf32, #tpu.memory_space<smem>>, %arg5: memref<1xf32, #tpu.memory_space<smem>>) attributes {dimension_semantics = [], scalar_prefetch = 0 : i64, scratch_operands = 0 : i64, tpu.core_type = #tpu.core_type<tc>} {
    %c0 = arith.constant 0 : index
    %0 = memref.load %arg0[%c0] : memref<1xf32, #tpu.memory_space<smem>>
    %c0_0 = arith.constant 0 : index
    %1 = memref.load %arg1[%c0_0] : memref<1xf32, #tpu.memory_space<smem>>
    %2 = arith.addf %0, %1 : f32
    %c0_1 = arith.constant 0 : index
    %3 = memref.load %arg2[%c0_1] : memref<1xf32, #tpu.memory_space<smem>>
    %4 = arith.addf %2, %3 : f32
    %c0_2 = arith.constant 0 : index
    %5 = memref.load %arg3[%c0_2] : memref<1xf32, #tpu.memory_space<smem>>
    %6 = arith.addf %4, %5 : f32
    %c0_3 = arith.constant 0 : index
    %7 = memref.load %arg4[%c0_3] : memref<1xf32, #tpu.memory_space<smem>>
    %8 = arith.addf %6, %7 : f32
    %c0_4 = arith.constant 0 : index
    %9 = memref.load %arg5[%c0_4] : memref<1xf32, #tpu.memory_space<smem>>
    memref.store %8, %arg5[%c0_4] : memref<1xf32, #tpu.memory_space<smem>>
    return
  }
}

</mosaic_0001>

<llo_original>
// kernel: tpu_custom_call.1
$region0: #{tpu_custom_call.1}
  #allocation0 [shape = 'u32[]', space=smem, size = 0x4, offset = 0x4, fixed_abs, tag = 'smem constant byte address 0x4 - core index']
  #allocation1 [shape = 'u32[72,128]{1,0:T(1,128)}', space=vmem, size = 0x9000, scoped, tag = 'internal scratch']
  #allocation2 [shape = 'f32[1]{0:T(128)S(6)}', space=smem, size = 0x200, scoped, tag = 'scoped memory for tpu_custom_call.1']
  #allocation3 [shape = 'f32[1]{0:T(128)S(6)}', space=smem, size = 0x200, scoped, tag = 'scoped memory for tpu_custom_call.1']
  #allocation4 [shape = 'f32[1]{0:T(128)S(6)}', space=smem, size = 0x200, scoped, tag = 'scoped memory for tpu_custom_call.1']
  #allocation5 [shape = 'f32[1]{0:T(128)S(6)}', space=smem, size = 0x200, scoped, tag = 'scoped memory for tpu_custom_call.1']
  #allocation6 [shape = 'f32[1]{0:T(128)S(6)}', space=smem, size = 0x200, scoped, tag = 'scoped memory for tpu_custom_call.1']
  %s0 = inlined_call_operand.<no memory space> [shape: f32[1], index: 0, kind: input, shape index: {}]
  %s1 = inlined_call_operand.<no memory space> [shape: f32[1], index: 1, kind: input, shape index: {}]
  %s2 = inlined_call_operand.<no memory space> [shape: f32[1], index: 2, kind: input, shape index: {}]
  %s3 = inlined_call_operand.<no memory space> [shape: f32[1], index: 3, kind: input, shape index: {}]
  %s4 = inlined_call_operand.<no memory space> [shape: f32[1], index: 4, kind: input, shape index: {}]
  %s5 = inlined_call_operand.hbm [shape: f32[1], index: 5, kind: output, shape index: {}]
  %s6 = sld [smem:[#allocation0]]
  $region30: #{tpu_custom_call.1} parent=0
    _
  %s8 = ssub.s32 1, %s6
  %s9 = scalar_select 0, %s8, %s6
  %10 = sst [smem:[#allocation2]] %s0
  %11 = sst [smem:[#allocation3]] %s1
  %12 = sst [smem:[#allocation4]] %s2
  %13 = sst [smem:[#allocation5]] %s3
  %14 = sst [smem:[#allocation6]] %s4
  $region1: #{tpu_custom_call.1} parent=0
    #allocation7 [shape = 'u8[512]{0}', space=smem, size = 0x200, scoped, tag = 'output window, operand 0, single buffered']
    #allocation8 [shape = 's32[1]{0}', space=sflag, size = 0x4, scoped, tag = 'scoped memory for tpu_custom_call.1']
    %15 = vsyncpa [#allocation8], 0
    // Predicated region
    $region2: #{tpu_custom_call.1} parent=1 // pred_check
      _
    $region3: #{tpu_custom_call.1} parent=1 // pred_check_branch
      %17 = sbr.rel (0) target = $region5
    $region4: #{tpu_custom_call.1} parent=1 // pred_region
      _
    $region5: #{tpu_custom_call.1} parent=1 // pred_fallthru
      _
    // Predicated region
    $region6: #{tpu_custom_call.1} parent=1 // pred_check
      _
    $region7: #{tpu_custom_call.1} parent=1 // pred_check_branch
      %19 = sbr.rel (0) target = $region9
    $region8: #{tpu_custom_call.1} parent=1 // pred_region
      _
    $region9: #{tpu_custom_call.1} parent=1 // pred_fallthru
      _
    // Predicated region
    $region10: #{tpu_custom_call.1} parent=1 // pred_check
      _
    $region11: #{tpu_custom_call.1} parent=1 // pred_check_branch
      %21 = sbr.rel (0) target = $region13
    $region12: #{tpu_custom_call.1} parent=1 // pred_region
      _
    $region13: #{tpu_custom_call.1} parent=1 // pred_fallthru
      _
    // Predicated region
    $region14: #{tpu_custom_call.1} parent=1 // pred_check
      _
    $region15: #{tpu_custom_call.1} parent=1 // pred_check_branch
      %23 = sbr.rel (0) target = $region17
    $region16: #{tpu_custom_call.1} parent=1 // pred_region
      _
    $region17: #{tpu_custom_call.1} parent=1 // pred_fallthru
      _
    // Predicated region
    $region18: #{tpu_custom_call.1} parent=1 // pred_check
      _
    $region19: #{tpu_custom_call.1} parent=1 // pred_check_branch
      %25 = sbr.rel (0) target = $region21
    $region20: #{tpu_custom_call.1} parent=1 // pred_region
      _
    $region21: #{tpu_custom_call.1} parent=1 // pred_fallthru
      _
    %s26 = sld [smem:[#allocation2]]
    %s27 = sld [smem:[#allocation3]]
    %s28 = sadd.f32 %s26, %s27
    %s29 = sld [smem:[#allocation4]]
    %s30 = sadd.f32 %s28, %s29
    %s31 = sld [smem:[#allocation5]]
    %s32 = sadd.f32 %s30, %s31
    %s33 = sld [smem:[#allocation6]]
    %s34 = sadd.f32 %s32, %s33
    %s35 = scalar_lea.smem [#allocation7], 0
    %36 = sst [smem:[%s35]] %s34
    // Predicated region
    $region22: #{tpu_custom_call.1} parent=1 // pred_check
      _
    $region23: #{tpu_custom_call.1} parent=1 // pred_check_branch
      %38 = sbr.rel (0) target = $region25
    $region24: #{tpu_custom_call.1} parent=1 // pred_region
      %40 = vsyncadd [#allocation8], 0
      %s42 = sshll.u32 %s5, 4
      %s43 = int_to_ptr.hbm [resolvable:$true] %s42
      %45 = dma.smem_to_hbm [#allocation7], 16, %s43, [#allocation8]
    $region25: #{tpu_custom_call.1} parent=1 // pred_fallthru
      _
    // Predicated region
    $region26: #{tpu_custom_call.1} parent=1 // pred_check
      _
    $region27: #{tpu_custom_call.1} parent=1 // pred_check_branch
      %47 = sbr.rel (0) target = $region29
    $region28: #{tpu_custom_call.1} parent=1 // pred_region
      %49 = dma.done [#allocation8], 16
    $region29: #{tpu_custom_call.1} parent=1 // pred_fallthru
      _
    %50 = sfence
    %51 = vsyncpa [#allocation8], 1

</llo_original>
